<compile_context>
chip_gen: v5e
topology: v5e:2x2
jax: 0.10.0
libtpu: 0.0.40
codegen_flags: <defaults>
</compile_context>

<pallas_src>
import jax
import jax.numpy as jnp
from jax import lax
from jax.experimental import pallas as pl
from jax.experimental.pallas import tpu as pltpu


def _rotation_head_kernel(x_ref, w_ref, b_ref, o_ref):
    # x_ref: (tb, K), w_ref: (N, K) native nn.Linear layout, b_ref: (1, N),
    # o_ref: (tb, N).  Contract the K (lane) axis of both operands on the MXU
    # with an f32 accumulator, add the bias on the VPU in f32, then cast.
    acc = lax.dot_general(
        x_ref[...],
        w_ref[...],
        dimension_numbers=(((1,), (1,)), ((), ())),
        preferred_element_type=jnp.float32,
    )
    o_ref[...] = (acc + b_ref[...].astype(jnp.float32)).astype(o_ref.dtype)


def prepare_rotation_params(weight, bias):
    """One-time parameter prep (call at load time, not per forward).

    Keeps the weight in its native [N, K] layout (best DMA shape) and stores
    the bias persistently as a 2-D (1, N) array so the forward path has no
    per-call reshapes.
    """
    return weight, bias.reshape(1, -1)


def rotation_model_forward(state, weight, bias2d, *, block_b=512):
    """Pallas equivalent of RotationModel.forward.

    state:  [B, state_size]                (f32 or bf16)
    weight: [4, state_size]                native PyTorch nn.Linear layout
    bias2d: [1, 4]                         from prepare_rotation_params
    returns rotation_logits: [B, 4] in state.dtype
    """
    B, K = state.shape
    N, Kw = weight.shape
    assert Kw == K and bias2d.shape == (1, N)

    # Row tile: full batch when small, capped at block_b rows when large so the
    # kernel pipelines over B instead of mapping the whole array into VMEM.
    tb = B if B <= block_b else block_b
    nb = pl.cdiv(B, tb)

    bytes_accessed = (
        state.dtype.itemsize * (B * K + B * N)
        + weight.dtype.itemsize * (N * K)
        + bias2d.dtype.itemsize * N
    )
    cost = pl.CostEstimate(
        flops=2 * B * K * N,
        bytes_accessed=bytes_accessed,
        transcendentals=0,
    )

    return pl.pallas_call(
        _rotation_head_kernel,
        out_shape=jax.ShapeDtypeStruct((B, N), state.dtype),
        grid=(nb,),
        in_specs=[
            pl.BlockSpec((tb, K), lambda i: (i, 0)),   # state: tiled over rows
            pl.BlockSpec((N, K), lambda i: (0, 0)),    # weight: resident
            pl.BlockSpec((1, N), lambda i: (0, 0)),    # bias: resident
        ],
        out_specs=pl.BlockSpec((tb, N), lambda i: (i, 0)),
        compiler_params=pltpu.CompilerParams(
            dimension_semantics=("parallel",),
        ),
        cost_estimate=cost,
    )(state, weight, bias2d)


if __name__ == "__main__":
    state_size = 1568   # module default
    batch = 8           # one full sublane group
    num_rotations = 4

    key = jax.random.PRNGKey(0)
    k_x, k_w, k_b = jax.random.split(key, 3)

    # Deterministic synthetic parameters (PyTorch-like uniform init scale).
    bound = 1.0 / (state_size ** 0.5)
    weight = jax.random.uniform(
        k_w, (num_rotations, state_size), jnp.float32, -bound, bound
    )
    bias = jax.random.uniform(
        k_b, (num_rotations,), jnp.float32, -bound, bound
    )
    state = jax.random.normal(k_x, (batch, state_size), jnp.float32)

    # One-time parameter prep (load time).
    weight_p, bias2d = prepare_rotation_params(weight, bias)

    logits = rotation_model_forward(state, weight_p, bias2d)
    logits = jax.block_until_ready(logits)

    # Sanity check against plain-JAX reference of nn.Linear.
    ref = state @ weight.T + bias
    assert logits.shape == (batch, num_rotations)
    assert jnp.allclose(logits, ref, atol=1e-3, rtol=1e-3)

    print("KERNEL_OK")
</pallas_src>

<mosaic_0001>
module attributes {stable_mosaic.version = 11 : i64} {
  func.func @_rotation_head_kernel(%arg0: i32, %arg1: memref<8x1568xf32, #tpu.memory_space<vmem>>, %arg2: memref<4x1568xf32, #tpu.memory_space<vmem>>, %arg3: memref<1x4xf32, #tpu.memory_space<vmem>>, %arg4: memref<8x4xf32, #tpu.memory_space<vmem>>) attributes {dimension_semantics = [#tpu.dimension_semantics<parallel>], iteration_bounds = array<i64: 1>, scalar_prefetch = 0 : i64, scratch_operands = 0 : i64, tpu.core_type = #tpu.core_type<tc>, window_params = [{transform_indices = @transform_0, window_bounds = array<i64: 8, 1568>}, {pipeline_mode = #tpu.pipeline_mode<synchronous>, transform_indices = @transform_1, window_bounds = array<i64: 4, 1568>}, {pipeline_mode = #tpu.pipeline_mode<synchronous>, transform_indices = @transform_2, window_bounds = array<i64: 1, 4>}, {transform_indices = @transform_3, window_bounds = array<i64: 8, 4>}]} {
    %c0 = arith.constant 0 : index
    %c0_0 = arith.constant 0 : index
    %0 = vector.load %arg1[%c0, %c0_0] : memref<8x1568xf32, #tpu.memory_space<vmem>>, vector<8x1568xf32>
    %c0_1 = arith.constant 0 : index
    %c0_2 = arith.constant 0 : index
    %1 = vector.load %arg2[%c0_1, %c0_2] : memref<4x1568xf32, #tpu.memory_space<vmem>>, vector<4x1568xf32>
    %cst = arith.constant dense<0.000000e+00> : vector<8x4xf32>
    %2 = tpu.matmul %0, %1, %cst {dimension_numbers = #tpu.dot_dimension_numbers<[1], [1], [0], [0], [0, 0, 1, 0], [], []>} : vector<8x1568xf32>, vector<4x1568xf32>, vector<8x4xf32> -> vector<8x4xf32>
    %c0_3 = arith.constant 0 : index
    %c0_4 = arith.constant 0 : index
    %3 = vector.load %arg3[%c0_3, %c0_4] : memref<1x4xf32, #tpu.memory_space<vmem>>, vector<1x4xf32>
    %4 = vector.broadcast %3 : vector<1x4xf32> to vector<8x4xf32>
    %5 = arith.addf %2, %4 : vector<8x4xf32>
    %c0_5 = arith.constant 0 : index
    %c0_6 = arith.constant 0 : index
    %6 = vector.load %arg4[%c0_5, %c0_6] : memref<8x4xf32, #tpu.memory_space<vmem>>, vector<8x4xf32>
    tpu.vector_store %arg4[%c0_5, %c0_6], %5 {strides = array<i32>} : memref<8x4xf32, #tpu.memory_space<vmem>>, vector<8x4xf32>,
    return
  }
  func.func @transform_0(%arg0: i32) -> (i32, i32) {
    %c0_i32 = arith.constant 0 : i32
    %c0_i32_0 = arith.constant 0 : i32
    return %arg0, %c0_i32 : i32, i32
  }
  func.func @transform_1(%arg0: i32) -> (i32, i32) {
    %c0_i32 = arith.constant 0 : i32
    %c0_i32_0 = arith.constant 0 : i32
    %c0_i32_1 = arith.constant 0 : i32
    return %c0_i32, %c0_i32_0 : i32, i32
  }
  func.func @transform_2(%arg0: i32) -> (i32, i32) {
    %c0_i32 = arith.constant 0 : i32
    %c0_i32_0 = arith.constant 0 : i32
    %c0_i32_1 = arith.constant 0 : i32
    return %c0_i32, %c0_i32_0 : i32, i32
  }
  func.func @transform_3(%arg0: i32) -> (i32, i32) {
    %c0_i32 = arith.constant 0 : i32
    %c0_i32_0 = arith.constant 0 : i32
    return %arg0, %c0_i32 : i32, i32
  }
}

</mosaic_0001>

<llo_original>
// kernel: tpu_custom_call.1
$region0: #{tpu_custom_call.1}
  #allocation0 [shape = 'u32[]', space=smem, size = 0x4, offset = 0x4, fixed_abs, tag = 'smem constant byte address 0x4 - core index']
  #allocation1 [shape = 'u32[72,128]{1,0:T(1,128)}', space=vmem, size = 0x9000, scoped, tag = 'internal scratch']
  %s0 = inlined_call_operand.hbm [shape: f32[8,1568], index: 0, kind: input, shape index: {}]
  %s1 = inlined_call_operand.hbm [shape: f32[4,1568], index: 1, kind: input, shape index: {}]
  %s2 = inlined_call_operand.vmem [shape: f32[1,4], index: 2, kind: input, shape index: {}]
  %s3 = inlined_call_operand.vmem [shape: f32[8,4], index: 3, kind: output, shape index: {}]
  %s4 = sld [smem:[#allocation0]]
  $region30: #{tpu_custom_call.1} parent=0
    _
  %s6 = ssub.s32 1, %s4
  %s7 = scalar_select 0, %s6, %s4
  $region1: #{tpu_custom_call.1} parent=0
    #allocation2 [shape = 'u8[53248]{0}', space=vmem, size = 0xd000, scoped, tag = 'input window, operand 0, single buffered']
    #allocation3 [shape = 's32[1]{0}', space=sflag, size = 0x4, scoped, tag = 'scoped memory for tpu_custom_call.1']
    #allocation4 [shape = 'u8[26624]{0}', space=vmem, size = 0x6800, scoped, tag = 'input window, operand 1, single buffered']
    #allocation5 [shape = 's32[1]{0}', space=sflag, size = 0x4, scoped, tag = 'scoped memory for tpu_custom_call.1']
    %8 = vsyncpa [#allocation3], 0
    %9 = vsyncpa [#allocation5], 0
    // Predicated region
    $region2: #{tpu_custom_call.1} parent=1 // pred_check
      _
    $region3: #{tpu_custom_call.1} parent=1 // pred_check_branch
      %11 = sbr.rel (0) target = $region5
    $region4: #{tpu_custom_call.1} parent=1 // pred_region
      %13 = vsyncadd [#allocation3], 0
      %s15 = sshll.u32 %s0, 4
      %s16 = int_to_ptr.hbm [resolvable:$true] %s15
      %s17 = sshll.u32 [#allocation2], 4
      %s18 = int_to_ptr.vmem [resolvable:$true] %s17
      %20 = dma.hbm_to_vmem [thread:$0]  %s16, 1664, %s18, [#allocation3]
    $region5: #{tpu_custom_call.1} parent=1 // pred_fallthru
      _
    // Predicated region
    $region6: #{tpu_custom_call.1} parent=1 // pred_check
      _
    $region7: #{tpu_custom_call.1} parent=1 // pred_check_branch
      %22 = sbr.rel (0) target = $region9
    $region8: #{tpu_custom_call.1} parent=1 // pred_region
      %24 = vsyncadd [#allocation5], 0
      %s26 = sshll.u32 %s1, 4
      %s27 = int_to_ptr.hbm [resolvable:$true] %s26
      %s28 = sshll.u32 [#allocation4], 4
      %s29 = int_to_ptr.vmem [resolvable:$true] %s28
      %31 = dma.hbm_to_vmem [thread:$0]  %s27, 832, %s29, [#allocation5]
    $region9: #{tpu_custom_call.1} parent=1 // pred_fallthru
      _
    // Predicated region
    $region10: #{tpu_custom_call.1} parent=1 // pred_check
      _
    $region11: #{tpu_custom_call.1} parent=1 // pred_check_branch
      %33 = sbr.rel (0) target = $region13
    $region12: #{tpu_custom_call.1} parent=1 // pred_region
      _
    $region13: #{tpu_custom_call.1} parent=1 // pred_fallthru
      _
    // Predicated region
    $region14: #{tpu_custom_call.1} parent=1 // pred_check
      _
    $region15: #{tpu_custom_call.1} parent=1 // pred_check_branch
      %35 = sbr.rel (0) target = $region17
    $region16: #{tpu_custom_call.1} parent=1 // pred_region
      %37 = dma.done [#allocation3], 1664
    $region17: #{tpu_custom_call.1} parent=1 // pred_fallthru
      _
    // Predicated region
    $region18: #{tpu_custom_call.1} parent=1 // pred_check
      _
    $region19: #{tpu_custom_call.1} parent=1 // pred_check_branch
      %39 = sbr.rel (0) target = $region21
    $region20: #{tpu_custom_call.1} parent=1 // pred_region
      %41 = dma.done [#allocation5], 832
    $region21: #{tpu_custom_call.1} parent=1 // pred_fallthru
      _
    %v42 = vld [vmem:[#allocation2] sm:$0xff]
    %v43 = vld [vmem:[#allocation2 + $0x8] sm:$0xff]
    %v44 = vld [vmem:[#allocation2 + $0x10] sm:$0xff]
    %v45 = vld [vmem:[#allocation2 + $0x18] sm:$0xff]
    %v46 = vld [vmem:[#allocation2 + $0x20] sm:$0xff]
    %v47 = vld [vmem:[#allocation2 + $0x28] sm:$0xff]
    %v48 = vld [vmem:[#allocation2 + $0x30] sm:$0xff]
    %v49 = vld [vmem:[#allocation2 + $0x38] sm:$0xff]
    %v50 = vld [vmem:[#allocation2 + $0x40] sm:$0xff]
    %v51 = vld [vmem:[#allocation2 + $0x48] sm:$0xff]
    %v52 = vld [vmem:[#allocation2 + $0x50] sm:$0xff]
    %v53 = vld [vmem:[#allocation2 + $0x58] sm:$0xff]
    %v54 = vld [vmem:[#allocation2 + $0x60] sm:$0xff]
    %v55 = vld [vmem:[#allocation4] sm:$0xff]
    %v56 = vld [vmem:[#allocation4 + $0x8] sm:$0xff]
    %v57 = vld [vmem:[#allocation4 + $0x10] sm:$0xff]
    %v58 = vld [vmem:[#allocation4 + $0x18] sm:$0xff]
    %v59 = vld [vmem:[#allocation4 + $0x20] sm:$0xff]
    %v60 = vld [vmem:[#allocation4 + $0x28] sm:$0xff]
    %v61 = vld [vmem:[#allocation4 + $0x30] sm:$0xf]
    %v62 = vld [vmem:[%s2] sm:$0x1]
    %v64 = vperm.slane %v62, 0
    %73 = vst [vmem:[#allocation1] ss:$2 sm:$0xff] %v55
    %s74 = scalar_lea.vmem [#allocation1], 16
    %75 = vst [vmem:[%s74] ss:$2 sm:$0xff] %v56
    %s76 = scalar_lea.vmem [#allocation1], 32
    %77 = vst [vmem:[%s76] ss:$2 sm:$0xff] %v57
    %s78 = scalar_lea.vmem [#allocation1], 48
    %79 = vst [vmem:[%s78] ss:$2 sm:$0xff] %v58
    %v80 = vld.sshfl [vmem:[#allocation1] sm:$0xff pattern:$0x75316420]
    %v81 = vld.sshfl [vmem:[#allocation1 + $0x8] sm:$0xff pattern:$0x75316420]
    %v82 = vld.sshfl [vmem:[#allocation1 + $0x10] sm:$0xff pattern:$0x75316420]
    %v83 = vld.sshfl [vmem:[#allocation1 + $0x18] sm:$0xff pattern:$0x75316420]
    %v84 = vld.sshfl [vmem:[#allocation1 + $0x20] sm:$0xff pattern:$0x75316420]
    %v85 = vld.sshfl [vmem:[#allocation1 + $0x28] sm:$0xff pattern:$0x75316420]
    %v86 = vld.sshfl [vmem:[#allocation1 + $0x30] sm:$0xff pattern:$0x75316420]
    %v87 = vld.sshfl [vmem:[#allocation1 + $0x38] sm:$0xff pattern:$0x75316420]
    %88 = vst [vmem:[#allocation1] ss:$2 sm:$0xff] %v59
    %89 = vst [vmem:[%s74] ss:$2 sm:$0xff] %v60
    %90 = vst [vmem:[%s76] ss:$2 sm:$0xff] %v61
    %v91 = vld.sshfl [vmem:[#allocation1] sm:$0xff pattern:$0x75316420]
    %v92 = vld.sshfl [vmem:[#allocation1 + $0x8] sm:$0xff pattern:$0x75316420]
    %v93 = vld.sshfl [vmem:[#allocation1 + $0x10] sm:$0xff pattern:$0x75316420]
    %v94 = vld.sshfl [vmem:[#allocation1 + $0x18] sm:$0xff pattern:$0x75316420]
    %v95 = vld.sshfl [vmem:[#allocation1 + $0x20] sm:$0xff pattern:$0x75316420]
    %vm108 = vcmask 261120
    %v110 = vsel %vm108, %v54, 0
    %v112 = vsel %vm108, %v95, 0
    %114 = vmatpush.xpose.msra.mxu0 0.0
    %115 = vmatpush.xpose.msra.mxu0 0.0
    %116 = vmatpush.xpose.msra.mxu0 0.0
    %117 = vmatpush.xpose.msra.mxu0 0.0
    %118 = vmatpush.xpose.msra.mxu0 0.0
    %119 = vmatpush.xpose.msra.mxu0 0.0
    %120 = vmatpush.xpose.msra.mxu0 0.0
    %121 = vmatpush.xpose.msra.mxu0 0.0
    %122 = vmatpush.xpose.msra.mxu0 0.0
    %123 = vmatpush.xpose.msra.mxu0 0.0
    %124 = vmatpush.xpose.msra.mxu0 0.0
    %125 = vmatpush.xpose.msra.mxu0 0.0
    %126 = vmatpush.xpose.msra.mxu0 0.0
    %127 = vmatpush.xpose.msra.mxu0 0.0
    %128 = vmatpush.xpose.msra.mxu0 0.0
    %129 = vmatpush.xpose.msra.mxu0 %v80
    %130 = vmatmul.f32.gmra.mxu0 %v42
    %v131 = vpop.f32.mrf.mxu0
    %v132 = vadd.f32 %v64, %v131
    %133 = vdwg.mxu0
    %134 = vmatpush.xpose.msra.mxu0 0.0
    %135 = vmatpush.xpose.msra.mxu0 0.0
    %136 = vmatpush.xpose.msra.mxu0 0.0
    %137 = vmatpush.xpose.msra.mxu0 0.0
    %138 = vmatpush.xpose.msra.mxu0 0.0
    %139 = vmatpush.xpose.msra.mxu0 0.0
    %140 = vmatpush.xpose.msra.mxu0 0.0
    %141 = vmatpush.xpose.msra.mxu0 0.0
    %142 = vmatpush.xpose.msra.mxu0 0.0
    %143 = vmatpush.xpose.msra.mxu0 0.0
    %144 = vmatpush.xpose.msra.mxu0 0.0
    %145 = vmatpush.xpose.msra.mxu0 0.0
    %146 = vmatpush.xpose.msra.mxu0 0.0
    %147 = vmatpush.xpose.msra.mxu0 0.0
    %148 = vmatpush.xpose.msra.mxu0 0.0
    %149 = vmatpush.xpose.msra.mxu0 %v81
    %150 = vmatmul.f32.gmra.mxu0 %v43
    %v151 = vpop.f32.mrf.mxu0
    %v152 = vadd.f32 %v132, %v151
    %153 = vdwg.mxu0
    %154 = vmatpush.xpose.msra.mxu0 0.0
    %155 = vmatpush.xpose.msra.mxu0 0.0
    %156 = vmatpush.xpose.msra.mxu0 0.0
    %157 = vmatpush.xpose.msra.mxu0 0.0
    %158 = vmatpush.xpose.msra.mxu0 0.0
    %159 = vmatpush.xpose.msra.mxu0 0.0
    %160 = vmatpush.xpose.msra.mxu0 0.0
    %161 = vmatpush.xpose.msra.mxu0 0.0
    %162 = vmatpush.xpose.msra.mxu0 0.0
    %163 = vmatpush.xpose.msra.mxu0 0.0
    %164 = vmatpush.xpose.msra.mxu0 0.0
    %165 = vmatpush.xpose.msra.mxu0 0.0
    %166 = vmatpush.xpose.msra.mxu0 0.0
    %167 = vmatpush.xpose.msra.mxu0 0.0
    %168 = vmatpush.xpose.msra.mxu0 0.0
    %169 = vmatpush.xpose.msra.mxu0 %v82
    %170 = vmatmul.f32.gmra.mxu0 %v44
    %v171 = vpop.f32.mrf.mxu0
    %v172 = vadd.f32 %v152, %v171
    %173 = vdwg.mxu0
    %174 = vmatpush.xpose.msra.mxu0 0.0
    %175 = vmatpush.xpose.msra.mxu0 0.0
    %176 = vmatpush.xpose.msra.mxu0 0.0
    %177 = vmatpush.xpose.msra.mxu0 0.0
    %178 = vmatpush.xpose.msra.mxu0 0.0
    %179 = vmatpush.xpose.msra.mxu0 0.0
    %180 = vmatpush.xpose.msra.mxu0 0.0
    %181 = vmatpush.xpose.msra.mxu0 0.0
    %182 = vmatpush.xpose.msra.mxu0 0.0
    %183 = vmatpush.xpose.msra.mxu0 0.0
    %184 = vmatpush.xpose.msra.mxu0 0.0
    %185 = vmatpush.xpose.msra.mxu0 0.0
    %186 = vmatpush.xpose.msra.mxu0 0.0
    %187 = vmatpush.xpose.msra.mxu0 0.0
    %188 = vmatpush.xpose.msra.mxu0 0.0
    %189 = vmatpush.xpose.msra.mxu0 %v83
    %190 = vmatmul.f32.gmra.mxu0 %v45
    %v191 = vpop.f32.mrf.mxu0
    %v192 = vadd.f32 %v172, %v191
    %193 = vdwg.mxu0
    %194 = vmatpush.xpose.msra.mxu0 0.0
    %195 = vmatpush.xpose.msra.mxu0 0.0
    %196 = vmatpush.xpose.msra.mxu0 0.0
    %197 = vmatpush.xpose.msra.mxu0 0.0
    %198 = vmatpush.xpose.msra.mxu0 0.0
    %199 = vmatpush.xpose.msra.mxu0 0.0
    %200 = vmatpush.xpose.msra.mxu0 0.0
    %201 = vmatpush.xpose.msra.mxu0 0.0
    %202 = vmatpush.xpose.msra.mxu0 0.0
    %203 = vmatpush.xpose.msra.mxu0 0.0
    %204 = vmatpush.xpose.msra.mxu0 0.0
    %205 = vmatpush.xpose.msra.mxu0 0.0
    %206 = vmatpush.xpose.msra.mxu0 0.0
    %207 = vmatpush.xpose.msra.mxu0 0.0
    %208 = vmatpush.xpose.msra.mxu0 0.0
    %209 = vmatpush.xpose.msra.mxu0 %v84
    %210 = vmatmul.f32.gmra.mxu0 %v46
    %v211 = vpop.f32.mrf.mxu0
    %v212 = vadd.f32 %v192, %v211
    %213 = vdwg.mxu0
    %214 = vmatpush.xpose.msra.mxu0 0.0
    %215 = vmatpush.xpose.msra.mxu0 0.0
    %216 = vmatpush.xpose.msra.mxu0 0.0
    %217 = vmatpush.xpose.msra.mxu0 0.0
    %218 = vmatpush.xpose.msra.mxu0 0.0
    %219 = vmatpush.xpose.msra.mxu0 0.0
    %220 = vmatpush.xpose.msra.mxu0 0.0
    %221 = vmatpush.xpose.msra.mxu0 0.0
    %222 = vmatpush.xpose.msra.mxu0 0.0
    %223 = vmatpush.xpose.msra.mxu0 0.0
    %224 = vmatpush.xpose.msra.mxu0 0.0
    %225 = vmatpush.xpose.msra.mxu0 0.0
    %226 = vmatpush.xpose.msra.mxu0 0.0
    %227 = vmatpush.xpose.msra.mxu0 0.0
    %228 = vmatpush.xpose.msra.mxu0 0.0
    %229 = vmatpush.xpose.msra.mxu0 %v85
    %230 = vmatmul.f32.gmra.mxu0 %v47
    %v231 = vpop.f32.mrf.mxu0
    %v232 = vadd.f32 %v212, %v231
    %233 = vdwg.mxu0
    %234 = vmatpush.xpose.msra.mxu0 0.0
    %235 = vmatpush.xpose.msra.mxu0 0.0
    %236 = vmatpush.xpose.msra.mxu0 0.0
    %237 = vmatpush.xpose.msra.mxu0 0.0
    %238 = vmatpush.xpose.msra.mxu0 0.0
    %239 = vmatpush.xpose.msra.mxu0 0.0
    %240 = vmatpush.xpose.msra.mxu0 0.0
    %241 = vmatpush.xpose.msra.mxu0 0.0
    %242 = vmatpush.xpose.msra.mxu0 0.0
    %243 = vmatpush.xpose.msra.mxu0 0.0
    %244 = vmatpush.xpose.msra.mxu0 0.0
    %245 = vmatpush.xpose.msra.mxu0 0.0
    %246 = vmatpush.xpose.msra.mxu0 0.0
    %247 = vmatpush.xpose.msra.mxu0 0.0
    %248 = vmatpush.xpose.msra.mxu0 0.0
    %249 = vmatpush.xpose.msra.mxu0 %v86
    %250 = vmatmul.f32.gmra.mxu0 %v48
    %v251 = vpop.f32.mrf.mxu0
    %v252 = vadd.f32 %v232, %v251
    %253 = vdwg.mxu0
    %254 = vmatpush.xpose.msra.mxu0 0.0
    %255 = vmatpush.xpose.msra.mxu0 0.0
    %256 = vmatpush.xpose.msra.mxu0 0.0
    %257 = vmatpush.xpose.msra.mxu0 0.0
    %258 = vmatpush.xpose.msra.mxu0 0.0
    %259 = vmatpush.xpose.msra.mxu0 0.0
    %260 = vmatpush.xpose.msra.mxu0 0.0
    %261 = vmatpush.xpose.msra.mxu0 0.0
    %262 = vmatpush.xpose.msra.mxu0 0.0
    %263 = vmatpush.xpose.msra.mxu0 0.0
    %264 = vmatpush.xpose.msra.mxu0 0.0
    %265 = vmatpush.xpose.msra.mxu0 0.0
    %266 = vmatpush.xpose.msra.mxu0 0.0
    %267 = vmatpush.xpose.msra.mxu0 0.0
    %268 = vmatpush.xpose.msra.mxu0 0.0
    %269 = vmatpush.xpose.msra.mxu0 %v87
    %270 = vmatmul.f32.gmra.mxu0 %v49
    %v271 = vpop.f32.mrf.mxu0
    %v272 = vadd.f32 %v252, %v271
    %273 = vdwg.mxu0
    %274 = vmatpush.xpose.msra.mxu0 0.0
    %275 = vmatpush.xpose.msra.mxu0 0.0
    %276 = vmatpush.xpose.msra.mxu0 0.0
    %277 = vmatpush.xpose.msra.mxu0 0.0
    %278 = vmatpush.xpose.msra.mxu0 0.0
    %279 = vmatpush.xpose.msra.mxu0 0.0
    %280 = vmatpush.xpose.msra.mxu0 0.0
    %281 = vmatpush.xpose.msra.mxu0 0.0
    %282 = vmatpush.xpose.msra.mxu0 0.0
    %283 = vmatpush.xpose.msra.mxu0 0.0
    %284 = vmatpush.xpose.msra.mxu0 0.0
    %285 = vmatpush.xpose.msra.mxu0 0.0
    %286 = vmatpush.xpose.msra.mxu0 0.0
    %287 = vmatpush.xpose.msra.mxu0 0.0
    %288 = vmatpush.xpose.msra.mxu0 0.0
    %289 = vmatpush.xpose.msra.mxu0 %v91
    %290 = vmatmul.f32.gmra.mxu0 %v50
    %v291 = vpop.f32.mrf.mxu0
    %v292 = vadd.f32 %v272, %v291
    %293 = vdwg.mxu0
    %294 = vmatpush.xpose.msra.mxu0 0.0
    %295 = vmatpush.xpose.msra.mxu0 0.0
    %296 = vmatpush.xpose.msra.mxu0 0.0
    %297 = vmatpush.xpose.msra.mxu0 0.0
    %298 = vmatpush.xpose.msra.mxu0 0.0
    %299 = vmatpush.xpose.msra.mxu0 0.0
    %300 = vmatpush.xpose.msra.mxu0 0.0
    %301 = vmatpush.xpose.msra.mxu0 0.0
    %302 = vmatpush.xpose.msra.mxu0 0.0
    %303 = vmatpush.xpose.msra.mxu0 0.0
    %304 = vmatpush.xpose.msra.mxu0 0.0
    %305 = vmatpush.xpose.msra.mxu0 0.0
    %306 = vmatpush.xpose.msra.mxu0 0.0
    %307 = vmatpush.xpose.msra.mxu0 0.0
    %308 = vmatpush.xpose.msra.mxu0 0.0
    %309 = vmatpush.xpose.msra.mxu0 %v92
    %310 = vmatmul.f32.gmra.mxu0 %v51
    %v311 = vpop.f32.mrf.mxu0
    %v312 = vadd.f32 %v292, %v311
    %313 = vdwg.mxu0
    %314 = vmatpush.xpose.msra.mxu0 0.0
    %315 = vmatpush.xpose.msra.mxu0 0.0
    %316 = vmatpush.xpose.msra.mxu0 0.0
    %317 = vmatpush.xpose.msra.mxu0 0.0
    %318 = vmatpush.xpose.msra.mxu0 0.0
    %319 = vmatpush.xpose.msra.mxu0 0.0
    %320 = vmatpush.xpose.msra.mxu0 0.0
    %321 = vmatpush.xpose.msra.mxu0 0.0
    %322 = vmatpush.xpose.msra.mxu0 0.0
    %323 = vmatpush.xpose.msra.mxu0 0.0
    %324 = vmatpush.xpose.msra.mxu0 0.0
    %325 = vmatpush.xpose.msra.mxu0 0.0
    %326 = vmatpush.xpose.msra.mxu0 0.0
    %327 = vmatpush.xpose.msra.mxu0 0.0
    %328 = vmatpush.xpose.msra.mxu0 0.0
    %329 = vmatpush.xpose.msra.mxu0 %v93
    %330 = vmatmul.f32.gmra.mxu0 %v52
    %v331 = vpop.f32.mrf.mxu0
    %v332 = vadd.f32 %v312, %v331
    %333 = vdwg.mxu0
    %334 = vmatpush.xpose.msra.mxu0 0.0
    %335 = vmatpush.xpose.msra.mxu0 0.0
    %336 = vmatpush.xpose.msra.mxu0 0.0
    %337 = vmatpush.xpose.msra.mxu0 0.0
    %338 = vmatpush.xpose.msra.mxu0 0.0
    %339 = vmatpush.xpose.msra.mxu0 0.0
    %340 = vmatpush.xpose.msra.mxu0 0.0
    %341 = vmatpush.xpose.msra.mxu0 0.0
    %342 = vmatpush.xpose.msra.mxu0 0.0
    %343 = vmatpush.xpose.msra.mxu0 0.0
    %344 = vmatpush.xpose.msra.mxu0 0.0
    %345 = vmatpush.xpose.msra.mxu0 0.0
    %346 = vmatpush.xpose.msra.mxu0 0.0
    %347 = vmatpush.xpose.msra.mxu0 0.0
    %348 = vmatpush.xpose.msra.mxu0 0.0
    %349 = vmatpush.xpose.msra.mxu0 %v94
    %350 = vmatmul.f32.gmra.mxu0 %v53
    %v351 = vpop.f32.mrf.mxu0
    %v352 = vadd.f32 %v332, %v351
    %353 = vdwg.mxu0
    %354 = vmatpush.xpose.msra.mxu0 0.0
    %355 = vmatpush.xpose.msra.mxu0 0.0
    %356 = vmatpush.xpose.msra.mxu0 0.0
    %357 = vmatpush.xpose.msra.mxu0 0.0
    %358 = vmatpush.xpose.msra.mxu0 0.0
    %359 = vmatpush.xpose.msra.mxu0 0.0
    %360 = vmatpush.xpose.msra.mxu0 0.0
    %361 = vmatpush.xpose.msra.mxu0 0.0
    %362 = vmatpush.xpose.msra.mxu0 0.0
    %363 = vmatpush.xpose.msra.mxu0 0.0
    %364 = vmatpush.xpose.msra.mxu0 0.0
    %365 = vmatpush.xpose.msra.mxu0 0.0
    %366 = vmatpush.xpose.msra.mxu0 0.0
    %367 = vmatpush.xpose.msra.mxu0 0.0
    %368 = vmatpush.xpose.msra.mxu0 0.0
    %369 = vmatpush.xpose.msra.mxu0 %v112
    %370 = vmatmul.f32.gmra.mxu0 %v110
    %v371 = vpop.f32.mrf.mxu0
    %v372 = vadd.f32 %v352, %v371
    %373 = vdwg.mxu0
    %vm374 = vcmask 31744
    %375 = vst.msk [vmem:[%s3] sm:$0xff] %vm374, %v372
    // Predicated region
    $region22: #{tpu_custom_call.1} parent=1 // pred_check
      _
    $region23: #{tpu_custom_call.1} parent=1 // pred_check_branch
      %377 = sbr.rel (0) target = $region25
    $region24: #{tpu_custom_call.1} parent=1 // pred_region
      _
    $region25: #{tpu_custom_call.1} parent=1 // pred_fallthru
      _
    // Predicated region
    $region26: #{tpu_custom_call.1} parent=1 // pred_check
      _
    $region27: #{tpu_custom_call.1} parent=1 // pred_check_branch
      %379 = sbr.rel (0) target = $region29
    $region28: #{tpu_custom_call.1} parent=1 // pred_region
      _
    $region29: #{tpu_custom_call.1} parent=1 // pred_fallthru
      _
    %380 = vsyncpa [#allocation3], 1
    %381 = vsyncpa [#allocation5], 1

</llo_original>
